<compile_context>
chip_gen: v7x
topology: tpu7x:2x2x1
jax: 0.10.0
libtpu: 0.0.40
codegen_flags: <defaults>
</compile_context>

<pallas_src>
import jax
import jax.numpy as jnp
import numpy as np
from jax.experimental import pallas as pl
from jax.experimental.pallas import tpu as pltpu

BN_EPS = 1e-5
LEAKY_SLOPE = 0.01  # nn.LeakyReLU() default


def _leaky_relu(x):
    # equivalent to where(x>=0, x, slope*x) for 0 < slope < 1
    return jnp.maximum(x, LEAKY_SLOPE * x)


def twin_critic_kernel(sa_ref, w1_ref, bn_ref, tail_ref, w2_hbm, out_ref,
                       w2_vmem, w2_sem):
    """Fused twin-critic forward.

    sa_ref   : [B, in_dim]     f32   (state|action, already concatenated)
    w1_ref   : [in_dim, 2*F1]  bf16  (critic1 | critic2 fc1 weights, concat on N)
    bn_ref   : [2, 2*F1]       f32   rows = (gamma, beta)
    tail_ref : [2, 3, F2]      f32   rows = (b2, w3_row, b3 broadcast)
    w2_hbm   : [2, F1, F2]     bf16  per-critic fc2 weights (HBM, manual DMA)
    out_ref  : [B, 2]          f32   columns = (q1, q2)
    w2_vmem  : [2, F1, F2]     bf16  VMEM scratch (DMA target)
    w2_sem   : DMA semaphore
    """
    F1 = w2_vmem.shape[1]

    # Kick off the W2 stream so it overlaps the fc1 + BatchNorm compute.
    w2_copy = pltpu.make_async_copy(w2_hbm, w2_vmem, w2_sem)
    w2_copy.start()

    # --- fused fc1 for both critics: bf16 x bf16 -> f32 on the MXU ---------
    sa = sa_ref[...].astype(jnp.bfloat16)
    h = jnp.dot(sa, w1_ref[...], preferred_element_type=jnp.float32)
    # (fc1 bias omitted: exactly cancelled by the batch-mean subtraction below)

    # --- BatchNorm1d (training mode), two-pass stats, folded scale/shift ---
    # TODO(synk): running-mean/var (momentum) side-effect updates of
    # nn.BatchNorm1d are not replicated; forward output is unaffected.
    mean = jnp.mean(h, axis=0, keepdims=True)
    centered = h - mean
    var = jnp.mean(centered * centered, axis=0, keepdims=True)
    scale = bn_ref[0:1, :] * jax.lax.rsqrt(var + BN_EPS)   # gamma / sqrt(var+eps)
    h = _leaky_relu(centered * scale + bn_ref[1:2, :])

    # W2 must be resident before the per-critic fc2 matmuls.
    w2_copy.wait()

    # --- per-critic fc2 + LeakyReLU + fc3 (fc3 as VPU mul + lane reduce) ---
    for c in range(2):
        hc = h[:, c * F1:(c + 1) * F1].astype(jnp.bfloat16)
        t = tail_ref[c]                                     # [3, F2] f32
        h2 = jnp.dot(hc, w2_vmem[c], preferred_element_type=jnp.float32) + t[0:1, :]
        h2 = _leaky_relu(h2)
        q = jnp.sum(h2 * t[1:2, :], axis=-1, keepdims=True) + t[2:3, 0:1]
        out_ref[:, c:c + 1] = q


def pack_twin_params(params1, params2):
    """One-time packing of the two critics' parameters into 4 DMA-friendly arrays."""
    def tail(p):
        _, _, _, _, _, b2, w3, b3 = p
        f2 = b2.shape[1]
        return jnp.stack([
            b2[0],                                    # fc2 bias        [F2]
            w3[:, 0],                                 # fc3 weight row  [F2]
            jnp.broadcast_to(b3[0, 0], (f2,)),        # fc3 bias (bcast)[F2]
        ], axis=0)                                    # [3, F2]

    w1 = jnp.concatenate([params1[0], params2[0]], axis=1).astype(jnp.bfloat16)
    bn = jnp.concatenate([
        jnp.concatenate([params1[2], params2[2]], axis=1),   # gamma
        jnp.concatenate([params1[3], params2[3]], axis=1),   # beta
    ], axis=0)                                               # [2, 2*F1] f32
    w2 = jnp.stack([params1[4], params2[4]], axis=0).astype(jnp.bfloat16)
    tails = jnp.stack([tail(params1), tail(params2)], axis=0)  # [2, 3, F2] f32
    return w1, bn, w2, tails


@jax.jit
def twin_critic_forward(sa, w1, bn, w2, tails):
    """sa: [B, state_size + action_size] f32, packed params.  Returns (q1, q2)."""
    B = sa.shape[0]
    _, F1, F2 = w2.shape
    vmem = pl.BlockSpec(memory_space=pltpu.MemorySpace.VMEM)
    out = pl.pallas_call(
        twin_critic_kernel,
        out_shape=jax.ShapeDtypeStruct((B, 2), jnp.float32),
        in_specs=[vmem, vmem, vmem, vmem,
                  pl.BlockSpec(memory_space=pl.ANY)],       # w2 stays in HBM; manual DMA
        out_specs=vmem,
        scratch_shapes=[pltpu.VMEM((2, F1, F2), jnp.bfloat16),
                        pltpu.SemaphoreType.DMA(())],
    )(sa, w1, bn, tails, w2)
    return out[:, 0:1], out[:, 1:2]


def init_critic_params(key, in_dim, fc1_units, fc2_units):
    """Synthetic init mirroring TwinCritic.reset_parameters shapes.

    Weights are stored as [in, out] (transposed vs. PyTorch's [out, in]).
    """
    ks = jax.random.split(key, 8)
    lim1 = 1.0 / np.sqrt(fc1_units)
    lim2 = 1.0 / np.sqrt(fc2_units)
    w1 = jax.random.uniform(ks[0], (in_dim, fc1_units), jnp.float32, -lim1, lim1)
    b1 = jax.random.uniform(ks[1], (1, fc1_units), jnp.float32, -lim1, lim1)
    gamma = jnp.ones((1, fc1_units), jnp.float32)   # BatchNorm1d weight
    beta = jnp.zeros((1, fc1_units), jnp.float32)   # BatchNorm1d bias
    w2 = jax.random.uniform(ks[2], (fc1_units, fc2_units), jnp.float32, -lim2, lim2)
    b2 = jax.random.uniform(ks[3], (1, fc2_units), jnp.float32, -lim2, lim2)
    w3 = jax.random.uniform(ks[4], (fc2_units, 1), jnp.float32, -3e-3, 3e-3)
    b3 = jax.random.uniform(ks[5], (1, 1), jnp.float32, -3e-3, 3e-3)
    return (w1, b1, gamma, beta, w2, b2, w3, b3)


def mirror_forward(sa, params):
    """Pure-JAX reference mirroring the kernel's exact numerics
    (bf16 weights + bf16 activations into the matmuls, no fc1 bias,
    two-pass BN stats, f32 accumulation)."""
    w1, _, gamma, beta, w2, b2, w3, b3 = params
    w1b = w1.astype(jnp.bfloat16)
    w2b = w2.astype(jnp.bfloat16)
    h = jnp.dot(sa.astype(jnp.bfloat16), w1b, preferred_element_type=jnp.float32)
    mean = jnp.mean(h, axis=0, keepdims=True)
    c = h - mean
    var = jnp.mean(c * c, axis=0, keepdims=True)
    h = c * (gamma * jax.lax.rsqrt(var + BN_EPS)) + beta
    h = jnp.maximum(h, LEAKY_SLOPE * h)
    h2 = jnp.dot(h.astype(jnp.bfloat16), w2b, preferred_element_type=jnp.float32) + b2
    h2 = jnp.maximum(h2, LEAKY_SLOPE * h2)
    return jnp.sum(h2 * w3[:, 0][None, :], axis=-1, keepdims=True) + b3[0, 0]


def reference_forward(sa, params):
    """Module-faithful pure-f32 reference (PyTorch TwinCritic, training-mode BN)."""
    w1, b1, gamma, beta, w2, b2, w3, b3 = params
    h = sa @ w1 + b1
    mean = jnp.mean(h, axis=0, keepdims=True)
    var = jnp.mean((h - mean) ** 2, axis=0, keepdims=True)
    h = (h - mean) / jnp.sqrt(var + BN_EPS) * gamma + beta
    h = jnp.where(h >= 0, h, LEAKY_SLOPE * h)
    h = h @ w2 + b2
    h = jnp.where(h >= 0, h, LEAKY_SLOPE * h)
    return h @ w3 + b3


if __name__ == "__main__":
    # Small, module-consistent shapes.
    batch = 8
    state_size = 16
    action_size = 4
    fc1_units = 512
    fc2_units = 256

    key = jax.random.PRNGKey(0)
    k_state, k_action, k_p1, k_p2 = jax.random.split(key, 4)

    state = jax.random.normal(k_state, (batch, state_size), jnp.float32)
    action = jax.random.normal(k_action, (batch, action_size), jnp.float32)

    # flatten + concat(state, action) done as glue in plain JAX (torch.cat equiv.)
    sa = jnp.concatenate([state.reshape(batch, -1), action], axis=1)

    params1 = init_critic_params(k_p1, state_size + action_size, fc1_units, fc2_units)
    params2 = init_critic_params(k_p2, state_size + action_size, fc1_units, fc2_units)

    # One-time packing (hoisted out of the per-step path).
    w1, bn, w2, tails = pack_twin_params(params1, params2)

    q1, q2 = twin_critic_forward(sa, w1, bn, w2, tails)
    q1 = jax.block_until_ready(q1)
    q2 = jax.block_until_ready(q2)

    # Tight check against a reference that mirrors the kernel's bf16 matmul math.
    q1_m = mirror_forward(sa, params1)
    q2_m = mirror_forward(sa, params2)
    np.testing.assert_allclose(np.asarray(q1), np.asarray(q1_m), rtol=1e-3, atol=1e-4)
    np.testing.assert_allclose(np.asarray(q2), np.asarray(q2_m), rtol=1e-3, atol=1e-4)

    # Loose check against the module-faithful full-f32 forward (bf16 weight /
    # activation quantization is an intentional deviation).
    q1_f = reference_forward(sa, params1)
    q2_f = reference_forward(sa, params2)
    np.testing.assert_allclose(np.asarray(q1), np.asarray(q1_f), rtol=5e-2, atol=5e-3)
    np.testing.assert_allclose(np.asarray(q2), np.asarray(q2_f), rtol=5e-2, atol=5e-3)

    print("KERNEL_OK")
</pallas_src>

<mosaic_0001>
module attributes {stable_mosaic.version = 11 : i64} {
  func.func @twin_critic_kernel(%arg0: memref<8x20xf32, #tpu.memory_space<vmem>>, %arg1: memref<20x1024xbf16, #tpu.memory_space<vmem>>, %arg2: memref<2x1024xf32, #tpu.memory_space<vmem>>, %arg3: memref<2x3x256xf32, #tpu.memory_space<vmem>>, %arg4: memref<2x512x256xbf16, #tpu.memory_space<any>>, %arg5: memref<8x2xf32, #tpu.memory_space<vmem>>, %arg6: memref<2x512x256xbf16, #tpu.memory_space<vmem>>, %arg7: memref<!tpu.dma_semaphore, #tpu.memory_space<semaphore_mem>>) attributes {dimension_semantics = [], scalar_prefetch = 0 : i64, scratch_operands = 2 : i64, tpu.core_type = #tpu.core_type<tc>} {
    tpu.enqueue_dma source(%arg4 : memref<2x512x256xbf16, #tpu.memory_space<any>>) target(%arg6 : memref<2x512x256xbf16, #tpu.memory_space<vmem>>) target_semaphore(%arg7 : memref<!tpu.dma_semaphore, #tpu.memory_space<semaphore_mem>>)
    %c0 = arith.constant 0 : index
    %c0_0 = arith.constant 0 : index
    %0 = vector.load %arg0[%c0, %c0_0] : memref<8x20xf32, #tpu.memory_space<vmem>>, vector<8x20xf32>
    %1 = arith.truncf %0 : vector<8x20xf32> to vector<8x20xbf16>
    %c0_1 = arith.constant 0 : index
    %c0_2 = arith.constant 0 : index
    %2 = vector.load %arg1[%c0_1, %c0_2] : memref<20x1024xbf16, #tpu.memory_space<vmem>>, vector<20x1024xbf16>
    %cst = arith.constant dense<0.000000e+00> : vector<8x1024xf32>
    %3 = tpu.matmul %1, %2, %cst {dimension_numbers = #tpu.dot_dimension_numbers<[1], [0], [0], [1], [0, 0, 1, 1], [], []>} : vector<8x20xbf16>, vector<20x1024xbf16>, vector<8x1024xf32> -> vector<8x1024xf32>
    %cst_3 = arith.constant dense<0.000000e+00> : vector<1024xf32>
    %4 = vector.multi_reduction <add>, %3, %cst_3 [0] : vector<8x1024xf32> to vector<1024xf32>
    %5 = vector.shape_cast %4 : vector<1024xf32> to vector<1x1024xf32>
    %cst_4 = arith.constant 8.000000e+00 : f32
    %6 = vector.broadcast %cst_4 : f32 to vector<1x1024xf32>
    %7 = arith.divf %5, %6 : vector<1x1024xf32>
    %8 = vector.broadcast %7 : vector<1x1024xf32> to vector<8x1024xf32>
    %9 = arith.subf %3, %8 : vector<8x1024xf32>
    %10 = arith.mulf %9, %9 : vector<8x1024xf32>
    %cst_5 = arith.constant dense<0.000000e+00> : vector<1024xf32>
    %11 = vector.multi_reduction <add>, %10, %cst_5 [0] : vector<8x1024xf32> to vector<1024xf32>
    %12 = vector.shape_cast %11 : vector<1024xf32> to vector<1x1024xf32>
    %cst_6 = arith.constant 8.000000e+00 : f32
    %13 = vector.broadcast %cst_6 : f32 to vector<1x1024xf32>
    %14 = arith.divf %12, %13 : vector<1x1024xf32>
    %c0_7 = arith.constant 0 : index
    %c0_8 = arith.constant 0 : index
    %15 = vector.load %arg2[%c0_7, %c0_8] : memref<2x1024xf32, #tpu.memory_space<vmem>>, vector<1x1024xf32>
    %cst_9 = arith.constant 9.99999974E-6 : f32
    %16 = vector.broadcast %cst_9 : f32 to vector<1x1024xf32>
    %17 = arith.addf %14, %16 : vector<1x1024xf32>
    %18 = math.rsqrt %17 : vector<1x1024xf32>
    %19 = arith.mulf %15, %18 : vector<1x1024xf32>
    %20 = vector.broadcast %19 : vector<1x1024xf32> to vector<8x1024xf32>
    %21 = arith.mulf %9, %20 : vector<8x1024xf32>
    %c1 = arith.constant 1 : index
    %c0_10 = arith.constant 0 : index
    %22 = vector.load %arg2[%c1, %c0_10] : memref<2x1024xf32, #tpu.memory_space<vmem>>, vector<1x1024xf32>
    %23 = vector.broadcast %22 : vector<1x1024xf32> to vector<8x1024xf32>
    %24 = arith.addf %21, %23 : vector<8x1024xf32>
    %cst_11 = arith.constant 0.00999999977 : f32
    %25 = vector.broadcast %cst_11 : f32 to vector<8x1024xf32>
    %26 = arith.mulf %25, %24 : vector<8x1024xf32>
    %27 = arith.maximumf %24, %26 : vector<8x1024xf32>
    tpu.wait_dma2 semaphore(%arg7 : memref<!tpu.dma_semaphore, #tpu.memory_space<semaphore_mem>>) src(%arg4 : memref<2x512x256xbf16, #tpu.memory_space<any>>) dst(%arg6 : memref<2x512x256xbf16, #tpu.memory_space<vmem>>)
    %28 = vector.extract_strided_slice %27 {offsets = [0, 0], sizes = [8, 512], strides = [1, 1]} : vector<8x1024xf32> to vector<8x512xf32>
    %29 = arith.truncf %28 : vector<8x512xf32> to vector<8x512xbf16>
    %c0_12 = arith.constant 0 : index
    %c0_13 = arith.constant 0 : index
    %c0_14 = arith.constant 0 : index
    %30 = vector.load %arg3[%c0_12, %c0_13, %c0_14] : memref<2x3x256xf32, #tpu.memory_space<vmem>>, vector<1x3x256xf32>
    %31 = vector.shape_cast %30 : vector<1x3x256xf32> to vector<3x256xf32>
    %c0_15 = arith.constant 0 : index
    %c0_16 = arith.constant 0 : index
    %c0_17 = arith.constant 0 : index
    %32 = vector.load %arg6[%c0_15, %c0_16, %c0_17] : memref<2x512x256xbf16, #tpu.memory_space<vmem>>, vector<1x512x256xbf16>
    %33 = vector.shape_cast %32 : vector<1x512x256xbf16> to vector<512x256xbf16>
    %cst_18 = arith.constant dense<0.000000e+00> : vector<8x256xf32>
    %34 = tpu.matmul %29, %33, %cst_18 {dimension_numbers = #tpu.dot_dimension_numbers<[1], [0], [0], [1], [0, 0, 1, 1], [], []>} : vector<8x512xbf16>, vector<512x256xbf16>, vector<8x256xf32> -> vector<8x256xf32>
    %35 = vector.extract_strided_slice %31 {offsets = [0, 0], sizes = [1, 256], strides = [1, 1]} : vector<3x256xf32> to vector<1x256xf32>
    %36 = vector.broadcast %35 : vector<1x256xf32> to vector<8x256xf32>
    %37 = arith.addf %34, %36 : vector<8x256xf32>
    %cst_19 = arith.constant 0.00999999977 : f32
    %38 = vector.broadcast %cst_19 : f32 to vector<8x256xf32>
    %39 = arith.mulf %38, %37 : vector<8x256xf32>
    %40 = arith.maximumf %37, %39 : vector<8x256xf32>
    %41 = vector.extract_strided_slice %31 {offsets = [1, 0], sizes = [1, 256], strides = [1, 1]} : vector<3x256xf32> to vector<1x256xf32>
    %42 = vector.broadcast %41 : vector<1x256xf32> to vector<8x256xf32>
    %43 = arith.mulf %40, %42 : vector<8x256xf32>
    %cst_20 = arith.constant dense<0.000000e+00> : vector<8xf32>
    %44 = vector.multi_reduction <add>, %43, %cst_20 [1] : vector<8x256xf32> to vector<8xf32>
    %45 = vector.shape_cast %44 : vector<8xf32> to vector<8x1xf32>
    %46 = vector.extract_strided_slice %31 {offsets = [2, 0], sizes = [1, 1], strides = [1, 1]} : vector<3x256xf32> to vector<1x1xf32>
    %47 = vector.broadcast %46 : vector<1x1xf32> to vector<8x1xf32>
    %48 = arith.addf %45, %47 : vector<8x1xf32>
    %c0_21 = arith.constant 0 : index
    %c0_22 = arith.constant 0 : index
    %49 = vector.load %arg5[%c0_21, %c0_22] : memref<8x2xf32, #tpu.memory_space<vmem>>, vector<8x1xf32>
    tpu.vector_store %arg5[%c0_21, %c0_22], %48 {strides = array<i32>} : memref<8x2xf32, #tpu.memory_space<vmem>>, vector<8x1xf32>,
    %50 = vector.extract_strided_slice %27 {offsets = [0, 512], sizes = [8, 512], strides = [1, 1]} : vector<8x1024xf32> to vector<8x512xf32>
    %51 = arith.truncf %50 : vector<8x512xf32> to vector<8x512xbf16>
    %c1_23 = arith.constant 1 : index
    %c0_24 = arith.constant 0 : index
    %c0_25 = arith.constant 0 : index
    %52 = vector.load %arg3[%c1_23, %c0_24, %c0_25] : memref<2x3x256xf32, #tpu.memory_space<vmem>>, vector<1x3x256xf32>
    %53 = vector.shape_cast %52 : vector<1x3x256xf32> to vector<3x256xf32>
    %c1_26 = arith.constant 1 : index
    %c0_27 = arith.constant 0 : index
    %c0_28 = arith.constant 0 : index
    %54 = vector.load %arg6[%c1_26, %c0_27, %c0_28] : memref<2x512x256xbf16, #tpu.memory_space<vmem>>, vector<1x512x256xbf16>
    %55 = vector.shape_cast %54 : vector<1x512x256xbf16> to vector<512x256xbf16>
    %cst_29 = arith.constant dense<0.000000e+00> : vector<8x256xf32>
    %56 = tpu.matmul %51, %55, %cst_29 {dimension_numbers = #tpu.dot_dimension_numbers<[1], [0], [0], [1], [0, 0, 1, 1], [], []>} : vector<8x512xbf16>, vector<512x256xbf16>, vector<8x256xf32> -> vector<8x256xf32>
    %57 = vector.extract_strided_slice %53 {offsets = [0, 0], sizes = [1, 256], strides = [1, 1]} : vector<3x256xf32> to vector<1x256xf32>
    %58 = vector.broadcast %57 : vector<1x256xf32> to vector<8x256xf32>
    %59 = arith.addf %56, %58 : vector<8x256xf32>
    %cst_30 = arith.constant 0.00999999977 : f32
    %60 = vector.broadcast %cst_30 : f32 to vector<8x256xf32>
    %61 = arith.mulf %60, %59 : vector<8x256xf32>
    %62 = arith.maximumf %59, %61 : vector<8x256xf32>
    %63 = vector.extract_strided_slice %53 {offsets = [1, 0], sizes = [1, 256], strides = [1, 1]} : vector<3x256xf32> to vector<1x256xf32>
    %64 = vector.broadcast %63 : vector<1x256xf32> to vector<8x256xf32>
    %65 = arith.mulf %62, %64 : vector<8x256xf32>
    %cst_31 = arith.constant dense<0.000000e+00> : vector<8xf32>
    %66 = vector.multi_reduction <add>, %65, %cst_31 [1] : vector<8x256xf32> to vector<8xf32>
    %67 = vector.shape_cast %66 : vector<8xf32> to vector<8x1xf32>
    %68 = vector.extract_strided_slice %53 {offsets = [2, 0], sizes = [1, 1], strides = [1, 1]} : vector<3x256xf32> to vector<1x1xf32>
    %69 = vector.broadcast %68 : vector<1x1xf32> to vector<8x1xf32>
    %70 = arith.addf %67, %69 : vector<8x1xf32>
    %c0_32 = arith.constant 0 : index
    %c1_33 = arith.constant 1 : index
    %71 = vector.load %arg5[%c0_32, %c1_33] : memref<8x2xf32, #tpu.memory_space<vmem>>, vector<8x1xf32>
    tpu.vector_store %arg5[%c0_32, %c1_33], %70 {strides = array<i32>} : memref<8x2xf32, #tpu.memory_space<vmem>>, vector<8x1xf32>,
    return
  }
}

</mosaic_0001>

<llo_original>
// kernel: twin_critic_forward.1
$region0: #{twin_critic_forward.1}
  #allocation0 [shape = 'u32[]', space=smem, size = 0x4, offset = 0x4, fixed_abs, tag = 'smem constant byte address 0x4 - core index']
  #allocation1 [shape = 'u32[144,128]{1,0:T(1,128)}', space=vmem, size = 0x12000, scoped, tag = 'internal scratch']
  #allocation2 [shape = 'bf16[2,512,256]{2,1,0:T(16,128)(2,1)}', space=vmem, size = 0x80000, scoped, tag = 'scratch operand']
  #allocation3 [shape = 's32[1]{0}', space=sflag, size = 0x4, scoped, tag = 'scratch operand']
  #allocation6 [shape = 's32[]', space=sflag, size = 0x4, offset = 0, fixed_abs, tag = 'sflag constant byte address 0x0 - dummy sync flag']
  %s0 = inlined_call_operand.vmem [shape: f32[8,20], index: 0, kind: input, shape index: {}]
  %s1 = inlined_call_operand.hbm [shape: bf16[20,1024], index: 1, kind: input, shape index: {}]
  %s2 = inlined_call_operand.vmem [shape: f32[2,1024], index: 2, kind: input, shape index: {}]
  %s3 = inlined_call_operand.vmem [shape: f32[2,3,256], index: 3, kind: input, shape index: {}]
  %s4 = inlined_call_operand.hbm [shape: bf16[2,512,256], index: 4, kind: input, shape index: {}]
  %s5 = inlined_call_operand.vmem [shape: f32[8,2], index: 5, kind: output, shape index: {}]
  %s6 = sld [smem:[#allocation0]]
  $region30: #{twin_critic_forward.1} parent=0
    _
  %s8 = ssub.s32 1, %s6
  %s9 = scalar_select 0, %s8, %s6
  $region1: #{twin_critic_forward.1} parent=0
    #allocation4 [shape = 'u8[49152]{0}', space=vmem, size = 0xc000, scoped, tag = 'input window, operand 1, single buffered']
    #allocation5 [shape = 's32[1]{0}', space=sflag, size = 0x4, scoped, tag = 'scoped memory for twin_critic_forward.1']
    #allocation7 [shape = 'u32[9]{0}', space=smem, size = 0x24, scoped, tag = 'DMA stride descriptor']
    %10 = vsyncpa [#allocation5], 0
    // Predicated region
    $region2: #{twin_critic_forward.1} parent=1 // pred_check
      _
    $region3: #{twin_critic_forward.1} parent=1 // pred_check_branch
      %12 = sbr.rel (0) target = $region5
    $region4: #{twin_critic_forward.1} parent=1 // pred_region
      _
    $region5: #{twin_critic_forward.1} parent=1 // pred_fallthru
      _
    // Predicated region
    $region6: #{twin_critic_forward.1} parent=1 // pred_check
      _
    $region7: #{twin_critic_forward.1} parent=1 // pred_check_branch
      %14 = sbr.rel (0) target = $region9
    $region8: #{twin_critic_forward.1} parent=1 // pred_region
      %s16 = ssub.s32 1536, 1536
      %17 = vsyncadd [#allocation5], %s16
      %s18 = sshll.u32 [#allocation4], 4
      %s19 = int_to_ptr.vmem [resolvable:$true] %s18
      %24 = dma.hbm_to_vmem [thread:$0]  %s1, 1536, %s19, [#allocation5], 512, 512, 32
    $region9: #{twin_critic_forward.1} parent=1 // pred_fallthru
      _
    // Predicated region
    $region10: #{twin_critic_forward.1} parent=1 // pred_check
      _
    $region11: #{twin_critic_forward.1} parent=1 // pred_check_branch
      %26 = sbr.rel (0) target = $region13
    $region12: #{twin_critic_forward.1} parent=1 // pred_region
      _
    $region13: #{twin_critic_forward.1} parent=1 // pred_fallthru
      _
    // Predicated region
    $region14: #{twin_critic_forward.1} parent=1 // pred_check
      _
    $region15: #{twin_critic_forward.1} parent=1 // pred_check_branch
      %28 = sbr.rel (0) target = $region17
    $region16: #{twin_critic_forward.1} parent=1 // pred_region
      _
    $region17: #{twin_critic_forward.1} parent=1 // pred_fallthru
      _
    // Predicated region
    $region18: #{twin_critic_forward.1} parent=1 // pred_check
      _
    $region19: #{twin_critic_forward.1} parent=1 // pred_check_branch
      %30 = sbr.rel (0) target = $region21
    $region20: #{twin_critic_forward.1} parent=1 // pred_region
      %31 = dma.done [#allocation5], 1536
    $region21: #{twin_critic_forward.1} parent=1 // pred_fallthru
      _
    %s34 = sshll.u32 1, 14
    %s35 = sxor.u32 4294967295, %s34
    %s37 = sld [smem:[#allocation0]]
    %s38 = sadd.s32 2, %s37
    %s40 = sshll.u32 7, 26
    %s41 = sxor.u32 4294967295, %s40
    %s42 = sand.u32 0, %s41
    %s43 = sshll.u32 %s38, 26
    %s44 = sor.u32 %s42, %s43
    %s45 = sshll.u32 [#allocation2], 4
    %s46 = int_to_ptr.vmem [resolvable:$true] %s45
    %49 = sst [smem:[#allocation7]] 256
    %s50 = scalar_lea.smem [#allocation7], 1
    %51 = sst [smem:[%s50]] 256
    %s52 = scalar_lea.smem [#allocation7], 2
    %53 = sst [smem:[%s52]] 2
    %s54 = scalar_lea.smem [#allocation7], 3
    %55 = sst [smem:[%s54]] 64
    %s56 = scalar_lea.smem [#allocation7], 4
    %57 = sst [smem:[%s56]] 128
    %s58 = scalar_lea.smem [#allocation7], 5
    %59 = sst [smem:[%s58]] 2
    %s60 = scalar_lea.smem [#allocation7], 6
    %61 = sst [smem:[%s60]] 128
    %s62 = scalar_lea.smem [#allocation7], 7
    %63 = sst [smem:[%s62]] 64
    %s64 = scalar_lea.smem [#allocation7], 8
    %65 = sst [smem:[%s64]] 4
    %67 = dma.general %s4, 16384, %s46, [#allocation3], [#allocation6], [#allocation7], %s44, 0
    %v68 = vld [vmem:[%s0] sm:$0xff]
    %v69 = vpack.c.bf16 %v68, %v68
    %v70 = vld [vmem:[#allocation4] sm:$0xff]
    %v71 = vld [vmem:[#allocation4 + $0x8] sm:$0xff]
    %v72 = vld [vmem:[#allocation4 + $0x10] sm:$0xff]
    %v73 = vld [vmem:[#allocation4 + $0x18] sm:$0xff]
    %v74 = vld [vmem:[#allocation4 + $0x20] sm:$0xff]
    %v75 = vld [vmem:[#allocation4 + $0x28] sm:$0xff]
    %v76 = vld [vmem:[#allocation4 + $0x30] sm:$0xff]
    %v77 = vld [vmem:[#allocation4 + $0x38] sm:$0xff]
    %v78 = vld [vmem:[#allocation4 + $0x40] sm:$0x33]
    %v79 = vld [vmem:[#allocation4 + $0x48] sm:$0x33]
    %v80 = vld [vmem:[#allocation4 + $0x50] sm:$0x33]
    %v81 = vld [vmem:[#allocation4 + $0x58] sm:$0x33]
    %v94 = vunpack.c.l.b16 %v70
    %v95 = vunpack.c.h.b16 %v70
    %v96 = vunpack.c.l.b16 %v71
    %v97 = vunpack.c.h.b16 %v71
    %v98 = vunpack.c.l.b16 %v72
    %v99 = vunpack.c.h.b16 %v72
    %v100 = vunpack.c.l.b16 %v73
    %v101 = vunpack.c.h.b16 %v73
    %v102 = vunpack.c.l.b16 %v74
    %v103 = vunpack.c.h.b16 %v74
    %v104 = vunpack.c.l.b16 %v75
    %v105 = vunpack.c.h.b16 %v75
    %v106 = vunpack.c.l.b16 %v76
    %v107 = vunpack.c.h.b16 %v76
    %v108 = vunpack.c.l.b16 %v77
    %v109 = vunpack.c.h.b16 %v77
    %v110 = vunpack.c.l.b16 %v78
    %v111 = vunpack.c.h.b16 %v78
    %v112 = vunpack.c.l.b16 %v79
    %v113 = vunpack.c.h.b16 %v79
    %v114 = vunpack.c.l.b16 %v80
    %v115 = vunpack.c.h.b16 %v80
    %v116 = vunpack.c.l.b16 %v81
    %v117 = vunpack.c.h.b16 %v81
    %v118 = vpack.c.b16 %v102, %v94
    %v119 = vpack.c.b16 %v103, %v95
    %v120 = vpack.c.b16 %v104, %v96
    %v121 = vpack.c.b16 %v105, %v97
    %v122 = vpack.c.b16 %v106, %v98
    %v123 = vpack.c.b16 %v107, %v99
    %v124 = vpack.c.b16 %v108, %v100
    %v125 = vpack.c.b16 %v109, %v101
    %v126 = vpack.c.b16 %v110, %v110
    %v127 = vpack.c.b16 %v111, %v111
    %v128 = vpack.c.b16 %v112, %v112
    %v129 = vpack.c.b16 %v113, %v113
    %v130 = vpack.c.b16 %v114, %v114
    %v131 = vpack.c.b16 %v115, %v115
    %v132 = vpack.c.b16 %v116, %v116
    %v133 = vpack.c.b16 %v117, %v117
    %vm142 = vcmask 162816
    %v144 = vsel %vm142, %v69, 0
    %vm146 = vcmask 1041408
    %v148 = vsel %vm146, %v126, 0
    %v151 = vsel %vm146, %v127, 0
    %v154 = vsel %vm146, %v128, 0
    %v157 = vsel %vm146, %v129, 0
    %v160 = vsel %vm146, %v130, 0
    %v163 = vsel %vm146, %v131, 0
    %v166 = vsel %vm146, %v132, 0
    %v169 = vsel %vm146, %v133, 0
    %171 = vmatprep.subr.bf16.mxu0 %v119
    %172 = vmatpush1.bf16.msra.mxu0 %v118
    %173 = vmatprep.subr.bf16.mxu0 %v151
    %174 = vmatpush1.bf16.msra.mxu0 %v148
    %175 = vmatprep.subr.bf16.mxu0 0
    %176 = vmatpush1.bf16.msra.mxu0 0
    %177 = vmatprep.subr.bf16.mxu0 0
    %178 = vmatpush1.bf16.msra.mxu0 0
    %179 = vmatprep.subr.bf16.mxu0 0
    %180 = vmatpush1.bf16.msra.mxu0 0
    %181 = vmatprep.subr.bf16.mxu0 0
    %182 = vmatpush1.bf16.msra.mxu0 0
    %183 = vmatprep.subr.bf16.mxu0 0
    %184 = vmatpush1.bf16.msra.mxu0 0
    %185 = vmatprep.subr.bf16.mxu0 0
    %186 = vmatpush1.bf16.msra.mxu0 0
    %187 = vmatprep.subr.bf16.mxu0 0
    %188 = vmatpush1.bf16.msra.mxu0 0
    %189 = vmatprep.subr.bf16.mxu0 0
    %190 = vmatpush1.bf16.msra.mxu0 0
    %191 = vmatprep.subr.bf16.mxu0 0
    %192 = vmatpush1.bf16.msra.mxu0 0
    %193 = vmatprep.subr.bf16.mxu0 0
    %194 = vmatpush1.bf16.msra.mxu0 0
    %195 = vmatprep.subr.bf16.mxu0 0
    %196 = vmatpush1.bf16.msra.mxu0 0
    %197 = vmatprep.subr.bf16.mxu0 0
    %198 = vmatpush1.bf16.msra.mxu0 0
    %199 = vmatprep.subr.bf16.mxu0 0
    %200 = vmatpush1.bf16.msra.mxu0 0
    %201 = vmatprep.subr.bf16.mxu0 0
    %202 = vmatpush1.bf16.msra.mxu0 0
    %203 = vmatprep.mubr.bf16.mxu0 0
    %204 = vmatmul.mubr.bf16.gmra.mrb[0].mxu0 %v144
    %v205 = vpop.f32.mrb[0].mxu0
    %v206 = vadd.f32 0.0, %v205
    %v207 = vpop.f32.mrb[0].mxu0
    %v208 = vadd.f32 0.0, %v207
    %v209 = vpop.f32.mrb[0].mxu0
    %v210 = vpop.f32.mrb[0].mxu0
    %211 = vdwg.mxu0
    %212 = vmatprep.subr.bf16.mxu0 %v121
    %213 = vmatpush1.bf16.msra.mxu0 %v120
    %214 = vmatprep.subr.bf16.mxu0 %v157
    %215 = vmatpush1.bf16.msra.mxu0 %v154
    %216 = vmatprep.subr.bf16.mxu0 0
    %217 = vmatpush1.bf16.msra.mxu0 0
    %218 = vmatprep.subr.bf16.mxu0 0
    %219 = vmatpush1.bf16.msra.mxu0 0
    %220 = vmatprep.subr.bf16.mxu0 0
    %221 = vmatpush1.bf16.msra.mxu0 0
    %222 = vmatprep.subr.bf16.mxu0 0
    %223 = vmatpush1.bf16.msra.mxu0 0
    %224 = vmatprep.subr.bf16.mxu0 0
    %225 = vmatpush1.bf16.msra.mxu0 0
    %226 = vmatprep.subr.bf16.mxu0 0
    %227 = vmatpush1.bf16.msra.mxu0 0
    %228 = vmatprep.subr.bf16.mxu0 0
    %229 = vmatpush1.bf16.msra.mxu0 0
    %230 = vmatprep.subr.bf16.mxu0 0
    %231 = vmatpush1.bf16.msra.mxu0 0
    %232 = vmatprep.subr.bf16.mxu0 0
    %233 = vmatpush1.bf16.msra.mxu0 0
    %234 = vmatprep.subr.bf16.mxu0 0
    %235 = vmatpush1.bf16.msra.mxu0 0
    %236 = vmatprep.subr.bf16.mxu0 0
    %237 = vmatpush1.bf16.msra.mxu0 0
    %238 = vmatprep.subr.bf16.mxu0 0
    %239 = vmatpush1.bf16.msra.mxu0 0
    %240 = vmatprep.subr.bf16.mxu0 0
    %241 = vmatpush1.bf16.msra.mxu0 0
    %242 = vmatprep.subr.bf16.mxu0 0
    %243 = vmatpush1.bf16.msra.mxu0 0
    %244 = vmatprep.mubr.bf16.mxu0 0
    %245 = vmatmul.mubr.bf16.gmra.mrb[0].mxu0 %v144
    %v246 = vpop.f32.mrb[0].mxu0
    %v247 = vadd.f32 0.0, %v246
    %v248 = vpop.f32.mrb[0].mxu0
    %v249 = vadd.f32 0.0, %v248
    %v250 = vpop.f32.mrb[0].mxu0
    %v251 = vpop.f32.mrb[0].mxu0
    %252 = vdwg.mxu0
    %253 = vmatprep.subr.bf16.mxu0 %v123
    %254 = vmatpush1.bf16.msra.mxu0 %v122
    %255 = vmatprep.subr.bf16.mxu0 %v163
    %256 = vmatpush1.bf16.msra.mxu0 %v160
    %257 = vmatprep.subr.bf16.mxu0 0
    %258 = vmatpush1.bf16.msra.mxu0 0
    %259 = vmatprep.subr.bf16.mxu0 0
    %260 = vmatpush1.bf16.msra.mxu0 0
    %261 = vmatprep.subr.bf16.mxu0 0
    %262 = vmatpush1.bf16.msra.mxu0 0
    %263 = vmatprep.subr.bf16.mxu0 0
    %264 = vmatpush1.bf16.msra.mxu0 0
    %265 = vmatprep.subr.bf16.mxu0 0
    %266 = vmatpush1.bf16.msra.mxu0 0
    %267 = vmatprep.subr.bf16.mxu0 0
    %268 = vmatpush1.bf16.msra.mxu0 0
    %269 = vmatprep.subr.bf16.mxu0 0
    %270 = vmatpush1.bf16.msra.mxu0 0
    %271 = vmatprep.subr.bf16.mxu0 0
    %272 = vmatpush1.bf16.msra.mxu0 0
    %273 = vmatprep.subr.bf16.mxu0 0
    %274 = vmatpush1.bf16.msra.mxu0 0
    %275 = vmatprep.subr.bf16.mxu0 0
    %276 = vmatpush1.bf16.msra.mxu0 0
    %277 = vmatprep.subr.bf16.mxu0 0
    %278 = vmatpush1.bf16.msra.mxu0 0
    %279 = vmatprep.subr.bf16.mxu0 0
    %280 = vmatpush1.bf16.msra.mxu0 0
    %281 = vmatprep.subr.bf16.mxu0 0
    %282 = vmatpush1.bf16.msra.mxu0 0
    %283 = vmatprep.subr.bf16.mxu0 0
    %284 = vmatpush1.bf16.msra.mxu0 0
    %285 = vmatprep.mubr.bf16.mxu0 0
    %286 = vmatmul.mubr.bf16.gmra.mrb[0].mxu0 %v144
    %v287 = vpop.f32.mrb[0].mxu0
    %v288 = vadd.f32 0.0, %v287
    %v289 = vpop.f32.mrb[0].mxu0
    %v290 = vadd.f32 0.0, %v289
    %v291 = vpop.f32.mrb[0].mxu0
    %v292 = vpop.f32.mrb[0].mxu0
    %293 = vdwg.mxu0
    %294 = vmatprep.subr.bf16.mxu0 %v125
    %295 = vmatpush1.bf16.msra.mxu0 %v124
    %296 = vmatprep.subr.bf16.mxu0 %v169
    %297 = vmatpush1.bf16.msra.mxu0 %v166
    %298 = vmatprep.subr.bf16.mxu0 0
    %299 = vmatpush1.bf16.msra.mxu0 0
    %300 = vmatprep.subr.bf16.mxu0 0
    %301 = vmatpush1.bf16.msra.mxu0 0
    %302 = vmatprep.subr.bf16.mxu0 0
    %303 = vmatpush1.bf16.msra.mxu0 0
    %304 = vmatprep.subr.bf16.mxu0 0
    %305 = vmatpush1.bf16.msra.mxu0 0
    %306 = vmatprep.subr.bf16.mxu0 0
    %307 = vmatpush1.bf16.msra.mxu0 0
    %308 = vmatprep.subr.bf16.mxu0 0
    %309 = vmatpush1.bf16.msra.mxu0 0
    %310 = vmatprep.subr.bf16.mxu0 0
    %311 = vmatpush1.bf16.msra.mxu0 0
    %312 = vmatprep.subr.bf16.mxu0 0
    %313 = vmatpush1.bf16.msra.mxu0 0
    %314 = vmatprep.subr.bf16.mxu0 0
    %315 = vmatpush1.bf16.msra.mxu0 0
    %316 = vmatprep.subr.bf16.mxu0 0
    %317 = vmatpush1.bf16.msra.mxu0 0
    %318 = vmatprep.subr.bf16.mxu0 0
    %319 = vmatpush1.bf16.msra.mxu0 0
    %320 = vmatprep.subr.bf16.mxu0 0
    %321 = vmatpush1.bf16.msra.mxu0 0
    %322 = vmatprep.subr.bf16.mxu0 0
    %323 = vmatpush1.bf16.msra.mxu0 0
    %324 = vmatprep.subr.bf16.mxu0 0
    %325 = vmatpush1.bf16.msra.mxu0 0
    %326 = vmatprep.mubr.bf16.mxu0 0
    %327 = vmatmul.mubr.bf16.gmra.mrb[0].mxu0 %v144
    %v328 = vpop.f32.mrb[0].mxu0
    %v329 = vadd.f32 0.0, %v328
    %v330 = vpop.f32.mrb[0].mxu0
    %v331 = vadd.f32 0.0, %v330
    %v332 = vpop.f32.mrb[0].mxu0
    %v333 = vpop.f32.mrb[0].mxu0
    %334 = vdwg.mxu0
    %v335 = vrot.slane %v206, 4
    %v336 = vadd.f32 %v206, %v335
    %v337 = vrot.slane %v336, 2
    %v338 = vadd.f32 %v336, %v337
    %v339 = vrot.slane %v338, 1
    %v340 = vadd.f32 %v338, %v339
    %v341 = vrot.slane %v208, 4
    %v342 = vadd.f32 %v208, %v341
    %v343 = vrot.slane %v342, 2
    %v344 = vadd.f32 %v342, %v343
    %v345 = vrot.slane %v344, 1
    %v346 = vadd.f32 %v344, %v345
    %v347 = vrot.slane %v247, 4
    %v348 = vadd.f32 %v247, %v347
    %v349 = vrot.slane %v348, 2
    %v350 = vadd.f32 %v348, %v349
    %v351 = vrot.slane %v350, 1
    %v352 = vadd.f32 %v350, %v351
    %v353 = vrot.slane %v249, 4
    %v354 = vadd.f32 %v249, %v353
    %v355 = vrot.slane %v354, 2
    %v356 = vadd.f32 %v354, %v355
    %v357 = vrot.slane %v356, 1
    %v358 = vadd.f32 %v356, %v357
    %v359 = vrot.slane %v288, 4
    %v360 = vadd.f32 %v288, %v359
    %v361 = vrot.slane %v360, 2
    %v362 = vadd.f32 %v360, %v361
    %v363 = vrot.slane %v362, 1
    %v364 = vadd.f32 %v362, %v363
    %v365 = vrot.slane %v290, 4
    %v366 = vadd.f32 %v290, %v365
    %v367 = vrot.slane %v366, 2
    %v368 = vadd.f32 %v366, %v367
    %v369 = vrot.slane %v368, 1
    %v370 = vadd.f32 %v368, %v369
    %v371 = vrot.slane %v329, 4
    %v372 = vadd.f32 %v329, %v371
    %v373 = vrot.slane %v372, 2
    %v374 = vadd.f32 %v372, %v373
    %v375 = vrot.slane %v374, 1
    %v376 = vadd.f32 %v374, %v375
    %v377 = vrot.slane %v331, 4
    %v378 = vadd.f32 %v331, %v377
    %v379 = vrot.slane %v378, 2
    %v380 = vadd.f32 %v378, %v379
    %v381 = vrot.slane %v380, 1
    %v382 = vadd.f32 %v380, %v381
    %v383 = vrcp.pop 8.0
    %v384 = vmul.f32 %v340, %v383
    %v385 = vmul.f32 %v346, %v383
    %v386 = vmul.f32 %v352, %v383
    %v387 = vmul.f32 %v358, %v383
    %v388 = vmul.f32 %v364, %v383
    %v389 = vmul.f32 %v370, %v383
    %v390 = vmul.f32 %v376, %v383
    %v391 = vmul.f32 %v382, %v383
    %v392 = vsub.f32 %v206, %v384
    %v393 = vsub.f32 %v208, %v385
    %v394 = vsub.f32 %v247, %v386
    %v395 = vsub.f32 %v249, %v387
    %v396 = vsub.f32 %v288, %v388
    %v397 = vsub.f32 %v290, %v389
    %v398 = vsub.f32 %v329, %v390
    %v399 = vsub.f32 %v331, %v391
    %v400 = vmul.f32 %v392, %v392
    %v401 = vmul.f32 %v393, %v393
    %v402 = vmul.f32 %v394, %v394
    %v403 = vmul.f32 %v395, %v395
    %v404 = vmul.f32 %v396, %v396
    %v405 = vmul.f32 %v397, %v397
    %v406 = vmul.f32 %v398, %v398
    %v407 = vmul.f32 %v399, %v399
    %v408 = vrot.slane %v400, 4
    %v409 = vadd.f32 %v400, %v408
    %v410 = vrot.slane %v409, 2
    %v411 = vadd.f32 %v409, %v410
    %v412 = vrot.slane %v411, 1
    %v413 = vadd.f32 %v411, %v412
    %v414 = vrot.slane %v401, 4
    %v415 = vadd.f32 %v401, %v414
    %v416 = vrot.slane %v415, 2
    %v417 = vadd.f32 %v415, %v416
    %v418 = vrot.slane %v417, 1
    %v419 = vadd.f32 %v417, %v418
    %v420 = vrot.slane %v402, 4
    %v421 = vadd.f32 %v402, %v420
    %v422 = vrot.slane %v421, 2
    %v423 = vadd.f32 %v421, %v422
    %v424 = vrot.slane %v423, 1
    %v425 = vadd.f32 %v423, %v424
    %v426 = vrot.slane %v403, 4
    %v427 = vadd.f32 %v403, %v426
    %v428 = vrot.slane %v427, 2
    %v429 = vadd.f32 %v427, %v428
    %v430 = vrot.slane %v429, 1
    %v431 = vadd.f32 %v429, %v430
    %v432 = vrot.slane %v404, 4
    %v433 = vadd.f32 %v404, %v432
    %v434 = vrot.slane %v433, 2
    %v435 = vadd.f32 %v433, %v434
    %v436 = vrot.slane %v435, 1
    %v437 = vadd.f32 %v435, %v436
    %v438 = vrot.slane %v405, 4
    %v439 = vadd.f32 %v405, %v438
    %v440 = vrot.slane %v439, 2
    %v441 = vadd.f32 %v439, %v440
    %v442 = vrot.slane %v441, 1
    %v443 = vadd.f32 %v441, %v442
    %v444 = vrot.slane %v406, 4
    %v445 = vadd.f32 %v406, %v444
    %v446 = vrot.slane %v445, 2
    %v447 = vadd.f32 %v445, %v446
    %v448 = vrot.slane %v447, 1
    %v449 = vadd.f32 %v447, %v448
    %v450 = vrot.slane %v407, 4
    %v451 = vadd.f32 %v407, %v450
    %v452 = vrot.slane %v451, 2
    %v453 = vadd.f32 %v451, %v452
    %v454 = vrot.slane %v453, 1
    %v455 = vadd.f32 %v453, %v454
    %v456 = vmul.f32 %v413, %v383
    %v457 = vmul.f32 %v419, %v383
    %v458 = vmul.f32 %v425, %v383
    %v459 = vmul.f32 %v431, %v383
    %v460 = vmul.f32 %v437, %v383
    %v461 = vmul.f32 %v443, %v383
    %v462 = vmul.f32 %v449, %v383
    %v463 = vmul.f32 %v455, %v383
    %v464 = vld [vmem:[%s2] ss:$2 sm:$0xff]
    %v465 = vadd.f32 %v456, 1e-05
    %v466 = vadd.f32 %v457, 1e-05
    %v467 = vadd.f32 %v458, 1e-05
    %v468 = vadd.f32 %v459, 1e-05
    %v469 = vadd.f32 %v460, 1e-05
    %v470 = vadd.f32 %v461, 1e-05
    %v471 = vadd.f32 %v462, 1e-05
    %v472 = vadd.f32 %v463, 1e-05
    %v473 = vrsqrt.pop %v465
    %v474 = vrsqrt.pop %v466
    %v475 = vrsqrt.pop %v467
    %v476 = vrsqrt.pop %v468
    %v477 = vrsqrt.pop %v469
    %v478 = vrsqrt.pop %v470
    %v479 = vrsqrt.pop %v471
    %v480 = vrsqrt.pop %v472
    %v489 = vcombine.low %v473, %v474
    %v490 = vcombine.low %v475, %v476
    %v491 = vcombine.low %v477, %v478
    %v492 = vcombine.low %v479, %v480
    %v494 = vunpack.c.l.s4 1966171168
    %v495 = vunpack.c.0.s8 %v494
    %v496 = vlaneseq
    %v497 = vshrl.u32 %v496, 7
    %v498 = vsub.s32 %v495, %v497
    %v499 = vrot.slane %v489, %v498
    %v501 = vunpack.c.l.s4 1966171168
    %v502 = vunpack.c.0.s8 %v501
    %v503 = vlaneseq
    %v504 = vshrl.u32 %v503, 7
    %v505 = vsub.s32 %v502, %v504
    %v506 = vrot.slane %v490, %v505
    %v508 = vunpack.c.l.s4 1966171168
    %v509 = vunpack.c.0.s8 %v508
    %v510 = vlaneseq
    %v511 = vshrl.u32 %v510, 7
    %v512 = vsub.s32 %v509, %v511
    %v513 = vrot.slane %v491, %v512
    %v515 = vunpack.c.l.s4 1966171168
    %v516 = vunpack.c.0.s8 %v515
    %v517 = vlaneseq
    %v518 = vshrl.u32 %v517, 7
    %v519 = vsub.s32 %v516, %v518
    %v520 = vrot.slane %v492, %v519
    %v521 = vcombine.low %v499, %v506
    %v522 = vcombine.low %v513, %v520
    %v524 = vunpack.c.l.s4 1966171168
    %v525 = vunpack.c.0.s8 %v524
    %v526 = vlaneseq
    %v527 = vshrl.u32 %v526, 7
    %v528 = vsub.s32 %v525, %v527
    %v529 = vrot.slane %v521, %v528
    %v531 = vunpack.c.l.s4 1966171168
    %v532 = vunpack.c.0.s8 %v531
    %v533 = vlaneseq
    %v534 = vshrl.u32 %v533, 7
    %v535 = vsub.s32 %v532, %v534
    %v536 = vrot.slane %v522, %v535
    %v537 = vcombine.low %v529, %v536
    %v539 = vmul.f32 %v464, %v537
    %v541 = vlaneseq
    %v542 = vshrl.u32 %v541, 7
    %v543 = vsub.s32 0, %v542
    %v544 = vrot.slane %v539, %v543
    %v545 = vlaneseq
    %v546 = vshrl.u32 %v545, 7
    %v547 = vsub.s32 1, %v546
    %v548 = vrot.slane %v539, %v547
    %v549 = vlaneseq
    %v550 = vshrl.u32 %v549, 7
    %v551 = vsub.s32 2, %v550
    %v552 = vrot.slane %v539, %v551
    %v553 = vlaneseq
    %v554 = vshrl.u32 %v553, 7
    %v555 = vsub.s32 3, %v554
    %v556 = vrot.slane %v539, %v555
    %v557 = vlaneseq
    %v558 = vshrl.u32 %v557, 7
    %v559 = vsub.s32 4, %v558
    %v560 = vrot.slane %v539, %v559
    %v561 = vlaneseq
    %v562 = vshrl.u32 %v561, 7
    %v563 = vsub.s32 5, %v562
    %v564 = vrot.slane %v539, %v563
    %v565 = vlaneseq
    %v566 = vshrl.u32 %v565, 7
    %v567 = vsub.s32 6, %v566
    %v568 = vrot.slane %v539, %v567
    %v569 = vlaneseq
    %v570 = vshrl.u32 %v569, 7
    %v571 = vsub.s32 7, %v570
    %v572 = vrot.slane %v539, %v571
    %v581 = vmul.f32 %v392, %v544
    %v582 = vmul.f32 %v393, %v548
    %v583 = vmul.f32 %v394, %v552
    %v584 = vmul.f32 %v395, %v556
    %v585 = vmul.f32 %v396, %v560
    %v586 = vmul.f32 %v397, %v564
    %v587 = vmul.f32 %v398, %v568
    %v588 = vmul.f32 %v399, %v572
    %s589 = scalar_lea.vmem %s2, 1
    %v590 = vld [vmem:[%s589] ss:$2 sm:$0xff]
    %v592 = vlaneseq
    %v593 = vshrl.u32 %v592, 7
    %v594 = vsub.s32 0, %v593
    %v595 = vrot.slane %v590, %v594
    %v596 = vlaneseq
    %v597 = vshrl.u32 %v596, 7
    %v598 = vsub.s32 1, %v597
    %v599 = vrot.slane %v590, %v598
    %v600 = vlaneseq
    %v601 = vshrl.u32 %v600, 7
    %v602 = vsub.s32 2, %v601
    %v603 = vrot.slane %v590, %v602
    %v604 = vlaneseq
    %v605 = vshrl.u32 %v604, 7
    %v606 = vsub.s32 3, %v605
    %v607 = vrot.slane %v590, %v606
    %v608 = vlaneseq
    %v609 = vshrl.u32 %v608, 7
    %v610 = vsub.s32 4, %v609
    %v611 = vrot.slane %v590, %v610
    %v612 = vlaneseq
    %v613 = vshrl.u32 %v612, 7
    %v614 = vsub.s32 5, %v613
    %v615 = vrot.slane %v590, %v614
    %v616 = vlaneseq
    %v617 = vshrl.u32 %v616, 7
    %v618 = vsub.s32 6, %v617
    %v619 = vrot.slane %v590, %v618
    %v620 = vlaneseq
    %v621 = vshrl.u32 %v620, 7
    %v622 = vsub.s32 7, %v621
    %v623 = vrot.slane %v590, %v622
    %v632 = vadd.f32 %v581, %v595
    %v633 = vadd.f32 %v582, %v599
    %v634 = vadd.f32 %v583, %v603
    %v635 = vadd.f32 %v584, %v607
    %v636 = vadd.f32 %v585, %v611
    %v637 = vadd.f32 %v586, %v615
    %v638 = vadd.f32 %v587, %v619
    %v639 = vadd.f32 %v588, %v623
    %v640 = vmul.f32 %v632, 0.01
    %v641 = vmul.f32 %v633, 0.01
    %v642 = vmul.f32 %v634, 0.01
    %v643 = vmul.f32 %v635, 0.01
    %v644 = vmul.f32 %v636, 0.01
    %v645 = vmul.f32 %v637, 0.01
    %v646 = vmul.f32 %v638, 0.01
    %v647 = vmul.f32 %v639, 0.01
    %v648 = vmax.f32 %v632, %v640
    %v649 = vmax.f32 %v633, %v641
    %v650 = vmax.f32 %v634, %v642
    %v651 = vmax.f32 %v635, %v643
    %v652 = vmax.f32 %v636, %v644
    %v653 = vmax.f32 %v637, %v645
    %v654 = vmax.f32 %v638, %v646
    %v655 = vmax.f32 %v639, %v647
    %s656 = smul.u32 4, 2
    %s657 = smul.u32 %s656, 64
    %s658 = smul.u32 %s657, 2
    %s659 = sshll.u32 %s658, 4
    %660 = dma.done [#allocation3], %s659
    %v661 = vpack.c.bf16 %v648, %v648
    %v662 = vpack.c.bf16 %v649, %v649
    %v663 = vpack.c.bf16 %v650, %v650
    %v664 = vpack.c.bf16 %v651, %v651
    %v665 = vld [vmem:[%s3] sm:$0x77]
    %v666 = vld [vmem:[#allocation2] sm:$0xff]
    %v667 = vld [vmem:[#allocation2 + $0x8] sm:$0xff]
    %v668 = vld [vmem:[#allocation2 + $0x10] sm:$0xff]
    %v669 = vld [vmem:[#allocation2 + $0x18] sm:$0xff]
    %v670 = vld [vmem:[#allocation2 + $0x20] sm:$0xff]
    %v671 = vld [vmem:[#allocation2 + $0x28] sm:$0xff]
    %v672 = vld [vmem:[#allocation2 + $0x30] sm:$0xff]
    %v673 = vld [vmem:[#allocation2 + $0x38] sm:$0xff]
    %v674 = vld [vmem:[#allocation2 + $0x40] sm:$0xff]
    %v675 = vld [vmem:[#allocation2 + $0x48] sm:$0xff]
    %v676 = vld [vmem:[#allocation2 + $0x50] sm:$0xff]
    %v677 = vld [vmem:[#allocation2 + $0x58] sm:$0xff]
    %v678 = vld [vmem:[#allocation2 + $0x60] sm:$0xff]
    %v679 = vld [vmem:[#allocation2 + $0x68] sm:$0xff]
    %v680 = vld [vmem:[#allocation2 + $0x70] sm:$0xff]
    %v681 = vld [vmem:[#allocation2 + $0x78] sm:$0xff]
    %v682 = vld [vmem:[#allocation2 + $0x80] sm:$0xff]
    %v683 = vld [vmem:[#allocation2 + $0x88] sm:$0xff]
    %v684 = vld [vmem:[#allocation2 + $0x90] sm:$0xff]
    %v685 = vld [vmem:[#allocation2 + $0x98] sm:$0xff]
    %v686 = vld [vmem:[#allocation2 + $0xa0] sm:$0xff]
    %v687 = vld [vmem:[#allocation2 + $0xa8] sm:$0xff]
    %v688 = vld [vmem:[#allocation2 + $0xb0] sm:$0xff]
    %v689 = vld [vmem:[#allocation2 + $0xb8] sm:$0xff]
    %v690 = vld [vmem:[#allocation2 + $0xc0] sm:$0xff]
    %v691 = vld [vmem:[#allocation2 + $0xc8] sm:$0xff]
    %v692 = vld [vmem:[#allocation2 + $0xd0] sm:$0xff]
    %v693 = vld [vmem:[#allocation2 + $0xd8] sm:$0xff]
    %v694 = vld [vmem:[#allocation2 + $0xe0] sm:$0xff]
    %v695 = vld [vmem:[#allocation2 + $0xe8] sm:$0xff]
    %v696 = vld [vmem:[#allocation2 + $0xf0] sm:$0xff]
    %v697 = vld [vmem:[#allocation2 + $0xf8] sm:$0xff]
    %v698 = vld [vmem:[#allocation2 + $0x100] sm:$0xff]
    %v699 = vld [vmem:[#allocation2 + $0x108] sm:$0xff]
    %v700 = vld [vmem:[#allocation2 + $0x110] sm:$0xff]
    %v701 = vld [vmem:[#allocation2 + $0x118] sm:$0xff]
    %v702 = vld [vmem:[#allocation2 + $0x120] sm:$0xff]
    %v703 = vld [vmem:[#allocation2 + $0x128] sm:$0xff]
    %v704 = vld [vmem:[#allocation2 + $0x130] sm:$0xff]
    %v705 = vld [vmem:[#allocation2 + $0x138] sm:$0xff]
    %v706 = vld [vmem:[#allocation2 + $0x140] sm:$0xff]
    %v707 = vld [vmem:[#allocation2 + $0x148] sm:$0xff]
    %v708 = vld [vmem:[#allocation2 + $0x150] sm:$0xff]
    %v709 = vld [vmem:[#allocation2 + $0x158] sm:$0xff]
    %v710 = vld [vmem:[#allocation2 + $0x160] sm:$0xff]
    %v711 = vld [vmem:[#allocation2 + $0x168] sm:$0xff]
    %v712 = vld [vmem:[#allocation2 + $0x170] sm:$0xff]
    %v713 = vld [vmem:[#allocation2 + $0x178] sm:$0xff]
    %v714 = vld [vmem:[#allocation2 + $0x180] sm:$0xff]
    %v715 = vld [vmem:[#allocation2 + $0x188] sm:$0xff]
    %v716 = vld [vmem:[#allocation2 + $0x190] sm:$0xff]
    %v717 = vld [vmem:[#allocation2 + $0x198] sm:$0xff]
    %v718 = vld [vmem:[#allocation2 + $0x1a0] sm:$0xff]
    %v719 = vld [vmem:[#allocation2 + $0x1a8] sm:$0xff]
    %v720 = vld [vmem:[#allocation2 + $0x1b0] sm:$0xff]
    %v721 = vld [vmem:[#allocation2 + $0x1b8] sm:$0xff]
    %v722 = vld [vmem:[#allocation2 + $0x1c0] sm:$0xff]
    %v723 = vld [vmem:[#allocation2 + $0x1c8] sm:$0xff]
    %v724 = vld [vmem:[#allocation2 + $0x1d0] sm:$0xff]
    %v725 = vld [vmem:[#allocation2 + $0x1d8] sm:$0xff]
    %v726 = vld [vmem:[#allocation2 + $0x1e0] sm:$0xff]
    %v727 = vld [vmem:[#allocation2 + $0x1e8] sm:$0xff]
    %v728 = vld [vmem:[#allocation2 + $0x1f0] sm:$0xff]
    %v729 = vld [vmem:[#allocation2 + $0x1f8] sm:$0xff]
    %v731 = vlaneseq
    %v732 = vshrl.u32 %v731, 7
    %v733 = vsub.s32 0, %v732
    %v734 = vrot.slane %v665, %v733
    %v735 = vlaneseq
    %v736 = vshrl.u32 %v735, 7
    %v737 = vsub.s32 4, %v736
    %v738 = vrot.slane %v665, %v737
    %v741 = vlaneseq
    %v742 = vshrl.u32 %v741, 7
    %v743 = vsub.s32 0, %v742
    %v744 = vrot.slane %v734, %v743
    %v745 = vlaneseq
    %v746 = vshrl.u32 %v745, 7
    %v747 = vsub.s32 0, %v746
    %v748 = vrot.slane %v738, %v747
    %749 = vmatprep.subr.bf16.mxu0 %v667
    %750 = vmatpush1.bf16.msra.mxu0 %v666
    %751 = vmatprep.subr.bf16.mxu0 %v669
    %752 = vmatpush1.bf16.msra.mxu0 %v668
    %753 = vmatprep.subr.bf16.mxu0 %v671
    %754 = vmatpush1.bf16.msra.mxu0 %v670
    %755 = vmatprep.subr.bf16.mxu0 %v673
    %756 = vmatpush1.bf16.msra.mxu0 %v672
    %757 = vmatprep.subr.bf16.mxu0 %v675
    %758 = vmatpush1.bf16.msra.mxu0 %v674
    %759 = vmatprep.subr.bf16.mxu0 %v677
    %760 = vmatpush1.bf16.msra.mxu0 %v676
    %761 = vmatprep.subr.bf16.mxu0 %v679
    %762 = vmatpush1.bf16.msra.mxu0 %v678
    %763 = vmatprep.subr.bf16.mxu0 %v681
    %764 = vmatpush1.bf16.msra.mxu0 %v680
    %765 = vmatprep.subr.bf16.mxu0 %v683
    %766 = vmatpush1.bf16.msra.mxu0 %v682
    %767 = vmatprep.subr.bf16.mxu0 %v685
    %768 = vmatpush1.bf16.msra.mxu0 %v684
    %769 = vmatprep.subr.bf16.mxu0 %v687
    %770 = vmatpush1.bf16.msra.mxu0 %v686
    %771 = vmatprep.subr.bf16.mxu0 %v689
    %772 = vmatpush1.bf16.msra.mxu0 %v688
    %773 = vmatprep.subr.bf16.mxu0 %v691
    %774 = vmatpush1.bf16.msra.mxu0 %v690
    %775 = vmatprep.subr.bf16.mxu0 %v693
    %776 = vmatpush1.bf16.msra.mxu0 %v692
    %777 = vmatprep.subr.bf16.mxu0 %v695
    %778 = vmatpush1.bf16.msra.mxu0 %v694
    %779 = vmatprep.subr.bf16.mxu0 %v697
    %780 = vmatpush1.bf16.msra.mxu0 %v696
    %781 = vmatprep.mubr.bf16.mxu0 %v662
    %782 = vmatmul.mubr.bf16.gmra.mrb[0].mxu0 %v661
    %v783 = vpop.f32.mrb[0].mxu0
    %v784 = vadd.f32 %v744, %v783
    %v785 = vpop.f32.mrb[0].mxu0
    %v786 = vadd.f32 %v748, %v785
    %v787 = vpop.f32.mrb[0].mxu0
    %v788 = vpop.f32.mrb[0].mxu0
    %789 = vdwg.mxu0
    %790 = vmatprep.subr.bf16.mxu0 %v699
    %791 = vmatpush1.bf16.msra.mxu0 %v698
    %792 = vmatprep.subr.bf16.mxu0 %v701
    %793 = vmatpush1.bf16.msra.mxu0 %v700
    %794 = vmatprep.subr.bf16.mxu0 %v703
    %795 = vmatpush1.bf16.msra.mxu0 %v702
    %796 = vmatprep.subr.bf16.mxu0 %v705
    %797 = vmatpush1.bf16.msra.mxu0 %v704
    %798 = vmatprep.subr.bf16.mxu0 %v707
    %799 = vmatpush1.bf16.msra.mxu0 %v706
    %800 = vmatprep.subr.bf16.mxu0 %v709
    %801 = vmatpush1.bf16.msra.mxu0 %v708
    %802 = vmatprep.subr.bf16.mxu0 %v711
    %803 = vmatpush1.bf16.msra.mxu0 %v710
    %804 = vmatprep.subr.bf16.mxu0 %v713
    %805 = vmatpush1.bf16.msra.mxu0 %v712
    %806 = vmatprep.subr.bf16.mxu0 %v715
    %807 = vmatpush1.bf16.msra.mxu0 %v714
    %808 = vmatprep.subr.bf16.mxu0 %v717
    %809 = vmatpush1.bf16.msra.mxu0 %v716
    %810 = vmatprep.subr.bf16.mxu0 %v719
    %811 = vmatpush1.bf16.msra.mxu0 %v718
    %812 = vmatprep.subr.bf16.mxu0 %v721
    %813 = vmatpush1.bf16.msra.mxu0 %v720
    %814 = vmatprep.subr.bf16.mxu0 %v723
    %815 = vmatpush1.bf16.msra.mxu0 %v722
    %816 = vmatprep.subr.bf16.mxu0 %v725
    %817 = vmatpush1.bf16.msra.mxu0 %v724
    %818 = vmatprep.subr.bf16.mxu0 %v727
    %819 = vmatpush1.bf16.msra.mxu0 %v726
    %820 = vmatprep.subr.bf16.mxu0 %v729
    %821 = vmatpush1.bf16.msra.mxu0 %v728
    %822 = vmatprep.mubr.bf16.mxu0 %v664
    %823 = vmatmul.mubr.bf16.gmra.mrb[0].mxu0 %v663
    %v824 = vpop.f32.mrb[0].mxu0
    %v825 = vadd.f32 %v784, %v824
    %v826 = vpop.f32.mrb[0].mxu0
    %v827 = vadd.f32 %v786, %v826
    %v828 = vpop.f32.mrb[0].mxu0
    %v829 = vpop.f32.mrb[0].mxu0
    %830 = vdwg.mxu0
    %v831 = vmul.f32 %v825, 0.01
    %v832 = vmul.f32 %v827, 0.01
    %v833 = vmax.f32 %v825, %v831
    %v834 = vmax.f32 %v827, %v832
    %v835 = vlaneseq
    %v836 = vshrl.u32 %v835, 7
    %v837 = vsub.s32 1, %v836
    %v838 = vrot.slane %v665, %v837
    %v839 = vlaneseq
    %v840 = vshrl.u32 %v839, 7
    %v841 = vsub.s32 5, %v840
    %v842 = vrot.slane %v665, %v841
    %v845 = vlaneseq
    %v846 = vshrl.u32 %v845, 7
    %v847 = vsub.s32 1, %v846
    %v848 = vrot.slane %v838, %v847
    %v849 = vlaneseq
    %v850 = vshrl.u32 %v849, 7
    %v851 = vsub.s32 1, %v850
    %v852 = vrot.slane %v842, %v851
    %v853 = vmul.f32 %v833, %v848
    %v854 = vmul.f32 %v834, %v852
    %v855 = vadd.f32 %v853, %v854
    %856 = vadd.xlane.f32.xlu0 %v855
    %v857 = vpop.xlane.xlu0 %856
    %v858 = vlaneseq
    %v859 = vshrl.u32 %v858, 7
    %v860 = vsub.s32 2, %v859
    %v861 = vrot.slane %v665, %v860
    %v862 = vadd.f32 %v857, %v861
    %vm863 = vcmask 7168
    %864 = vst.msk [vmem:[%s5] sm:$0xff] %vm863, %v862
    %v865 = vpack.c.bf16 %v652, %v652
    %v866 = vpack.c.bf16 %v653, %v653
    %v867 = vpack.c.bf16 %v654, %v654
    %v868 = vpack.c.bf16 %v655, %v655
    %s869 = scalar_lea.vmem %s3, 8
    %v870 = vld [vmem:[%s869] sm:$0x77]
    %s871 = scalar_lea.vmem [#allocation2], 512
    %v872 = vld [vmem:[%s871] sm:$0xff]
    %v873 = vld [vmem:[%s871 + $0x8] sm:$0xff]
    %v874 = vld [vmem:[%s871 + $0x10] sm:$0xff]
    %v875 = vld [vmem:[%s871 + $0x18] sm:$0xff]
    %v876 = vld [vmem:[%s871 + $0x20] sm:$0xff]
    %v877 = vld [vmem:[%s871 + $0x28] sm:$0xff]
    %v878 = vld [vmem:[%s871 + $0x30] sm:$0xff]
    %v879 = vld [vmem:[%s871 + $0x38] sm:$0xff]
    %v880 = vld [vmem:[%s871 + $0x40] sm:$0xff]
    %v881 = vld [vmem:[%s871 + $0x48] sm:$0xff]
    %v882 = vld [vmem:[%s871 + $0x50] sm:$0xff]
    %v883 = vld [vmem:[%s871 + $0x58] sm:$0xff]
    %v884 = vld [vmem:[%s871 + $0x60] sm:$0xff]
    %v885 = vld [vmem:[%s871 + $0x68] sm:$0xff]
    %v886 = vld [vmem:[%s871 + $0x70] sm:$0xff]
    %v887 = vld [vmem:[%s871 + $0x78] sm:$0xff]
    %v888 = vld [vmem:[%s871 + $0x80] sm:$0xff]
    %v889 = vld [vmem:[%s871 + $0x88] sm:$0xff]
    %v890 = vld [vmem:[%s871 + $0x90] sm:$0xff]
    %v891 = vld [vmem:[%s871 + $0x98] sm:$0xff]
    %v892 = vld [vmem:[%s871 + $0xa0] sm:$0xff]
    %v893 = vld [vmem:[%s871 + $0xa8] sm:$0xff]
    %v894 = vld [vmem:[%s871 + $0xb0] sm:$0xff]
    %v895 = vld [vmem:[%s871 + $0xb8] sm:$0xff]
    %v896 = vld [vmem:[%s871 + $0xc0] sm:$0xff]
    %v897 = vld [vmem:[%s871 + $0xc8] sm:$0xff]
    %v898 = vld [vmem:[%s871 + $0xd0] sm:$0xff]
    %v899 = vld [vmem:[%s871 + $0xd8] sm:$0xff]
    %v900 = vld [vmem:[%s871 + $0xe0] sm:$0xff]
    %v901 = vld [vmem:[%s871 + $0xe8] sm:$0xff]
    %v902 = vld [vmem:[%s871 + $0xf0] sm:$0xff]
    %v903 = vld [vmem:[%s871 + $0xf8] sm:$0xff]
    %v904 = vld [vmem:[%s871 + $0x100] sm:$0xff]
    %v905 = vld [vmem:[%s871 + $0x108] sm:$0xff]
    %v906 = vld [vmem:[%s871 + $0x110] sm:$0xff]
    %v907 = vld [vmem:[%s871 + $0x118] sm:$0xff]
    %v908 = vld [vmem:[%s871 + $0x120] sm:$0xff]
    %v909 = vld [vmem:[%s871 + $0x128] sm:$0xff]
    %v910 = vld [vmem:[%s871 + $0x130] sm:$0xff]
    %v911 = vld [vmem:[%s871 + $0x138] sm:$0xff]
    %v912 = vld [vmem:[%s871 + $0x140] sm:$0xff]
    %v913 = vld [vmem:[%s871 + $0x148] sm:$0xff]
    %v914 = vld [vmem:[%s871 + $0x150] sm:$0xff]
    %v915 = vld [vmem:[%s871 + $0x158] sm:$0xff]
    %v916 = vld [vmem:[%s871 + $0x160] sm:$0xff]
    %v917 = vld [vmem:[%s871 + $0x168] sm:$0xff]
    %v918 = vld [vmem:[%s871 + $0x170] sm:$0xff]
    %v919 = vld [vmem:[%s871 + $0x178] sm:$0xff]
    %v920 = vld [vmem:[%s871 + $0x180] sm:$0xff]
    %v921 = vld [vmem:[%s871 + $0x188] sm:$0xff]
    %v922 = vld [vmem:[%s871 + $0x190] sm:$0xff]
    %v923 = vld [vmem:[%s871 + $0x198] sm:$0xff]
    %v924 = vld [vmem:[%s871 + $0x1a0] sm:$0xff]
    %v925 = vld [vmem:[%s871 + $0x1a8] sm:$0xff]
    %v926 = vld [vmem:[%s871 + $0x1b0] sm:$0xff]
    %v927 = vld [vmem:[%s871 + $0x1b8] sm:$0xff]
    %v928 = vld [vmem:[%s871 + $0x1c0] sm:$0xff]
    %v929 = vld [vmem:[%s871 + $0x1c8] sm:$0xff]
    %v930 = vld [vmem:[%s871 + $0x1d0] sm:$0xff]
    %v931 = vld [vmem:[%s871 + $0x1d8] sm:$0xff]
    %v932 = vld [vmem:[%s871 + $0x1e0] sm:$0xff]
    %v933 = vld [vmem:[%s871 + $0x1e8] sm:$0xff]
    %v934 = vld [vmem:[%s871 + $0x1f0] sm:$0xff]
    %v935 = vld [vmem:[%s871 + $0x1f8] sm:$0xff]
    %v937 = vlaneseq
    %v938 = vshrl.u32 %v937, 7
    %v939 = vsub.s32 0, %v938
    %v940 = vrot.slane %v870, %v939
    %v941 = vlaneseq
    %v942 = vshrl.u32 %v941, 7
    %v943 = vsub.s32 4, %v942
    %v944 = vrot.slane %v870, %v943
    %v947 = vlaneseq
    %v948 = vshrl.u32 %v947, 7
    %v949 = vsub.s32 0, %v948
    %v950 = vrot.slane %v940, %v949
    %v951 = vlaneseq
    %v952 = vshrl.u32 %v951, 7
    %v953 = vsub.s32 0, %v952
    %v954 = vrot.slane %v944, %v953
    %955 = vmatprep.subr.bf16.mxu0 %v873
    %956 = vmatpush1.bf16.msra.mxu0 %v872
    %957 = vmatprep.subr.bf16.mxu0 %v875
    %958 = vmatpush1.bf16.msra.mxu0 %v874
    %959 = vmatprep.subr.bf16.mxu0 %v877
    %960 = vmatpush1.bf16.msra.mxu0 %v876
    %961 = vmatprep.subr.bf16.mxu0 %v879
    %962 = vmatpush1.bf16.msra.mxu0 %v878
    %963 = vmatprep.subr.bf16.mxu0 %v881
    %964 = vmatpush1.bf16.msra.mxu0 %v880
    %965 = vmatprep.subr.bf16.mxu0 %v883
    %966 = vmatpush1.bf16.msra.mxu0 %v882
    %967 = vmatprep.subr.bf16.mxu0 %v885
    %968 = vmatpush1.bf16.msra.mxu0 %v884
    %969 = vmatprep.subr.bf16.mxu0 %v887
    %970 = vmatpush1.bf16.msra.mxu0 %v886
    %971 = vmatprep.subr.bf16.mxu0 %v889
    %972 = vmatpush1.bf16.msra.mxu0 %v888
    %973 = vmatprep.subr.bf16.mxu0 %v891
    %974 = vmatpush1.bf16.msra.mxu0 %v890
    %975 = vmatprep.subr.bf16.mxu0 %v893
    %976 = vmatpush1.bf16.msra.mxu0 %v892
    %977 = vmatprep.subr.bf16.mxu0 %v895
    %978 = vmatpush1.bf16.msra.mxu0 %v894
    %979 = vmatprep.subr.bf16.mxu0 %v897
    %980 = vmatpush1.bf16.msra.mxu0 %v896
    %981 = vmatprep.subr.bf16.mxu0 %v899
    %982 = vmatpush1.bf16.msra.mxu0 %v898
    %983 = vmatprep.subr.bf16.mxu0 %v901
    %984 = vmatpush1.bf16.msra.mxu0 %v900
    %985 = vmatprep.subr.bf16.mxu0 %v903
    %986 = vmatpush1.bf16.msra.mxu0 %v902
    %987 = vmatprep.mubr.bf16.mxu0 %v866
    %988 = vmatmul.mubr.bf16.gmra.mrb[0].mxu0 %v865
    %v989 = vpop.f32.mrb[0].mxu0
    %v990 = vadd.f32 %v950, %v989
    %v991 = vpop.f32.mrb[0].mxu0
    %v992 = vadd.f32 %v954, %v991
    %v993 = vpop.f32.mrb[0].mxu0
    %v994 = vpop.f32.mrb[0].mxu0
    %995 = vdwg.mxu0
    %996 = vmatprep.subr.bf16.mxu0 %v905
    %997 = vmatpush1.bf16.msra.mxu0 %v904
    %998 = vmatprep.subr.bf16.mxu0 %v907
    %999 = vmatpush1.bf16.msra.mxu0 %v906
    %1000 = vmatprep.subr.bf16.mxu0 %v909
    %1001 = vmatpush1.bf16.msra.mxu0 %v908
    %1002 = vmatprep.subr.bf16.mxu0 %v911
    %1003 = vmatpush1.bf16.msra.mxu0 %v910
    %1004 = vmatprep.subr.bf16.mxu0 %v913
    %1005 = vmatpush1.bf16.msra.mxu0 %v912
    %1006 = vmatprep.subr.bf16.mxu0 %v915
    %1007 = vmatpush1.bf16.msra.mxu0 %v914
    %1008 = vmatprep.subr.bf16.mxu0 %v917
    %1009 = vmatpush1.bf16.msra.mxu0 %v916
    %1010 = vmatprep.subr.bf16.mxu0 %v919
    %1011 = vmatpush1.bf16.msra.mxu0 %v918
    %1012 = vmatprep.subr.bf16.mxu0 %v921
    %1013 = vmatpush1.bf16.msra.mxu0 %v920
    %1014 = vmatprep.subr.bf16.mxu0 %v923
    %1015 = vmatpush1.bf16.msra.mxu0 %v922
    %1016 = vmatprep.subr.bf16.mxu0 %v925
    %1017 = vmatpush1.bf16.msra.mxu0 %v924
    %1018 = vmatprep.subr.bf16.mxu0 %v927
    %1019 = vmatpush1.bf16.msra.mxu0 %v926
    %1020 = vmatprep.subr.bf16.mxu0 %v929
    %1021 = vmatpush1.bf16.msra.mxu0 %v928
    %1022 = vmatprep.subr.bf16.mxu0 %v931
    %1023 = vmatpush1.bf16.msra.mxu0 %v930
    %1024 = vmatprep.subr.bf16.mxu0 %v933
    %1025 = vmatpush1.bf16.msra.mxu0 %v932
    %1026 = vmatprep.subr.bf16.mxu0 %v935
    %1027 = vmatpush1.bf16.msra.mxu0 %v934
    %1028 = vmatprep.mubr.bf16.mxu0 %v868
    %1029 = vmatmul.mubr.bf16.gmra.mrb[0].mxu0 %v867
    %v1030 = vpop.f32.mrb[0].mxu0
    %v1031 = vadd.f32 %v990, %v1030
    %v1032 = vpop.f32.mrb[0].mxu0
    %v1033 = vadd.f32 %v992, %v1032
    %v1034 = vpop.f32.mrb[0].mxu0
    %v1035 = vpop.f32.mrb[0].mxu0
    %1036 = vdwg.mxu0
    %v1037 = vmul.f32 %v1031, 0.01
    %v1038 = vmul.f32 %v1033, 0.01
    %v1039 = vmax.f32 %v1031, %v1037
    %v1040 = vmax.f32 %v1033, %v1038
    %v1041 = vlaneseq
    %v1042 = vshrl.u32 %v1041, 7
    %v1043 = vsub.s32 1, %v1042
    %v1044 = vrot.slane %v870, %v1043
    %v1045 = vlaneseq
    %v1046 = vshrl.u32 %v1045, 7
    %v1047 = vsub.s32 5, %v1046
    %v1048 = vrot.slane %v870, %v1047
    %v1051 = vlaneseq
    %v1052 = vshrl.u32 %v1051, 7
    %v1053 = vsub.s32 1, %v1052
    %v1054 = vrot.slane %v1044, %v1053
    %v1055 = vlaneseq
    %v1056 = vshrl.u32 %v1055, 7
    %v1057 = vsub.s32 1, %v1056
    %v1058 = vrot.slane %v1048, %v1057
    %v1059 = vmul.f32 %v1039, %v1054
    %v1060 = vmul.f32 %v1040, %v1058
    %v1061 = vadd.f32 %v1059, %v1060
    %1062 = vadd.xlane.f32.xlu0 %v1061
    %v1063 = vpop.xlane.xlu0 %1062
    %v1064 = vlaneseq
    %v1065 = vshrl.u32 %v1064, 7
    %v1066 = vsub.s32 2, %v1065
    %v1067 = vrot.slane %v870, %v1066
    %v1068 = vadd.f32 %v1063, %v1067
    %1070 = vrot.lane.b32.xlu0 %v1068, 1
    %v1071 = vpop.permute.xlu0 %1070
    %vm1073 = vcmask 15368
    %1074 = vst.msk [vmem:[%s5] sm:$0xff] %vm1073, %v1071
    // Predicated region
    $region22: #{twin_critic_forward.1} parent=1 // pred_check
      _
    $region23: #{twin_critic_forward.1} parent=1 // pred_check_branch
      %1076 = sbr.rel (0) target = $region25
    $region24: #{twin_critic_forward.1} parent=1 // pred_region
      _
    $region25: #{twin_critic_forward.1} parent=1 // pred_fallthru
      _
    // Predicated region
    $region26: #{twin_critic_forward.1} parent=1 // pred_check
      _
    $region27: #{twin_critic_forward.1} parent=1 // pred_check_branch
      %1078 = sbr.rel (0) target = $region29
    $region28: #{twin_critic_forward.1} parent=1 // pred_region
      _
    $region29: #{twin_critic_forward.1} parent=1 // pred_fallthru
      _
    %1079 = vsyncpa [#allocation5], 1
  %1080 = vsyncmov [#allocation3]
  %s1081 = vpop.sfrf %1080
  %p1082 = scmp.eq.s32.totalorder %s1081, 0
  %p1083 = pneg %p1082
  %1085 = shalt.err (%p1083)

</llo_original>
